<compile_context>
chip_gen: v7x
topology: tpu7x:2x2x1
jax: 0.10.0
libtpu: 0.0.40
codegen_flags: <defaults>
</compile_context>

<pallas_src>
import functools

import numpy as np
import jax
import jax.numpy as jnp
from jax.experimental import pallas as pl
from jax.experimental.pallas import tpu as pltpu


def _attention_kernel(x_ref, xt_rep_ref, w_ref, consts_ref, head_mask_ref,
                      o_ref, *, batch, seq, num_heads, head_dim):
    C = num_heads * head_dim
    BN = batch * seq
    bf16 = jnp.bfloat16

    # ---- wrapper-precomputed constants (no in-kernel iota / select) --------
    batch01 = consts_ref[0:BN, :]                         # (BN, L) f32 {0,1}
    maskT = consts_ref[BN:BN + C, :]                      # (C, L)  f32 {0,1}
    bkT = consts_ref[BN + C:BN + 2 * C, :]                # (C, L)  f32 (b_k bcast)
    bias_row = consts_ref[BN + 2 * C:BN + 2 * C + 1, :]   # (1, L)  f32

    x = x_ref[...]                                        # (BN, C)  bf16
    xt_rep = xt_rep_ref[...]                              # (C, L)   bf16
    w_all = w_ref[...]                                    # (C, 4C)  bf16
    head_mask = head_mask_ref[...]                        # (L, C)   bf16

    # ---- fused Q / V projection (softmax scale folded into W_q, b_q) -------
    qv = jnp.dot(x, w_all[:, :2 * C],
                 preferred_element_type=jnp.float32) + bias_row[:, :2 * C]
    q = qv[:, :C].astype(bf16)                            # (BN, C)
    v = qv[:, C:2 * C].astype(bf16)                       # (BN, C)

    # ---- K slab, pre-transposed & head-block-diagonal: (C, L) --------------
    # kt_rep[c, j] = (x @ W_k)[j mod BN, c], built from the wrapper-replicated
    # x^T, so the score matmul below is a natural (M,K)@(K,N) and no in-kernel
    # transpose / transposed-operand contraction is needed.
    kt_rep = jnp.dot(w_all[:, 2 * C:3 * C], xt_rep,
                     preferred_element_type=jnp.float32)            # (C, L) f32
    kt_slab = ((kt_rep + bkT) * maskT).astype(bf16)                 # (C, L) bf16

    # ---- scores for every (query row, head, key): (BN, L) ------------------
    s = jnp.dot(q, kt_slab, preferred_element_type=jnp.float32)

    # ---- segmented softmax (per head block), cross-batch keys zeroed -------
    # Shared per-row max is a valid stabilizer (cancels per head block).
    e = jnp.exp(s - jnp.max(s, axis=-1, keepdims=True)) * batch01   # (BN, L)
    e16 = e.astype(bf16)

    # per-(row, head) denominators broadcast to channels, reusing head_mask
    denom = jnp.dot(e16, head_mask, preferred_element_type=jnp.float32)  # (BN, C)
    denom = jnp.maximum(denom, 1e-30)   # guard: a whole head block underflowing

    # ---- PV: V slab (L, C) = v replicated per head block, head-masked ------
    v_slab = jnp.concatenate([v] * num_heads, axis=0) * head_mask        # (L, C)
    o_un = jnp.dot(e16, v_slab, preferred_element_type=jnp.float32)      # (BN, C)
    attn = o_un * pl.reciprocal(denom, approx=True)

    # ---- output projection --------------------------------------------------
    y = jnp.dot(attn.astype(bf16), w_all[:, 3 * C:4 * C],
                preferred_element_type=jnp.float32) + bias_row[:, 2 * C:3 * C]
    o_ref[...] = y.astype(o_ref.dtype)


def attention3d_pallas(x, w_qkv, b_qkv, w_proj, b_proj, *, num_heads):
    """x: (B, N, C); w_qkv: (C, 3C); b_qkv: (3C,); w_proj: (C, C); b_proj: (C,)."""
    B, N, C = x.shape
    H = num_heads
    assert C % H == 0
    hd = C // H
    BN = B * N
    L = H * BN
    scale = hd ** (-0.5)
    # Sublane-aligned static slicing of the constants pack.
    assert BN % 8 == 0 and C % 8 == 0
    assert L >= 3 * C  # packed bias row fits in one L-wide row

    f32, bf16 = jnp.float32, jnp.bfloat16
    x2d = x.reshape(BN, C)

    # --- weights packed lane-adjacent into one (C, 4C) bf16 operand ----------
    w_q = w_qkv[:, :C] * scale          # softmax scale folded into Q (free)
    w_k = w_qkv[:, C:2 * C]
    w_v = w_qkv[:, 2 * C:]
    w_pack = jnp.concatenate([w_q, w_v, w_k.T, w_proj], axis=1).astype(bf16)

    b_q = b_qkv[:C] * scale
    b_k = b_qkv[C:2 * C]
    b_v = b_qkv[2 * C:]

    # --- trace-time constant masks / selectors (hoisted out of the kernel) ---
    tok = np.arange(L) % BN             # slab column -> token index
    hcol = np.arange(L) // BN           # slab column -> head index
    hchan = np.arange(C) // hd          # channel     -> head index

    maskT_np = (hchan[:, None] == hcol[None, :]).astype(np.float32)     # (C, L)
    head_mask_np = maskT_np.T                                           # (L, C)
    batch01_np = ((np.arange(BN)[:, None] // N) ==
                  (tok[None, :] // N)).astype(np.float32)               # (BN, L)

    bias_row = jnp.concatenate(
        [b_q, b_v, b_proj, jnp.zeros((L - 3 * C,), f32)])[None, :]      # (1, L)

    consts = jnp.concatenate([
        jnp.asarray(batch01_np, f32),                                   # [0, BN)
        jnp.asarray(maskT_np, f32),                                     # [BN, BN+C)
        jnp.broadcast_to(b_k[:, None], (C, L)).astype(f32),             # [BN+C, BN+2C)
        bias_row.astype(f32),                                           # row BN+2C
    ], axis=0)                                                          # (BN+2C+1, L)

    head_mask = jnp.asarray(head_mask_np, bf16)                         # (L, C)
    xt_rep = jnp.tile(x2d.T, (1, H)).astype(bf16)                       # (C, L)

    kernel = functools.partial(_attention_kernel, batch=B, seq=N,
                               num_heads=H, head_dim=hd)

    y = pl.pallas_call(
        kernel,
        out_shape=jax.ShapeDtypeStruct((BN, C), x.dtype),
        # whole-operand blocks, single invocation (no grid), everything in VMEM
        in_specs=[pl.BlockSpec(memory_space=pltpu.MemorySpace.VMEM)] * 5,
        out_specs=pl.BlockSpec(memory_space=pltpu.MemorySpace.VMEM),
    )(x2d.astype(bf16), xt_rep, w_pack, consts, head_mask)
    return y.reshape(B, N, C)


def attention3d_ref(x, w_qkv, b_qkv, w_proj, b_proj, *, num_heads):
    """Pure-JAX reference mirroring the PyTorch forward exactly (f32)."""
    B, N, C = x.shape
    head_dim = C // num_heads
    scale = head_dim ** (-0.5)
    qkv = x @ w_qkv + b_qkv                               # (B, N, 3C)
    qkv = qkv.reshape(B, N, 3, num_heads, head_dim)
    qkv = jnp.transpose(qkv, (2, 0, 3, 1, 4))             # (3, B, H, N, Dh)
    q, k, v = qkv[0], qkv[1], qkv[2]
    attn = jnp.einsum("bhnd,bhmd->bhnm", q, k) * scale
    attn = jax.nn.softmax(attn, axis=-1)
    out = jnp.einsum("bhnm,bhmd->bhnd", attn, v)          # (B, H, N, Dh)
    out = jnp.transpose(out, (0, 2, 1, 3)).reshape(B, N, C)
    return out @ w_proj + b_proj


if __name__ == "__main__":
    # Module hyper-params (small, consistent with the PyTorch forward).
    dim = 32
    num_heads = 8
    B, N = 2, 8

    key = jax.random.PRNGKey(0)
    kx, kw1, kb1, kw2, kb2 = jax.random.split(key, 5)

    x = jax.random.normal(kx, (B, N, dim), dtype=jnp.float32)

    # nn.Linear shapes: weight (out, in), bias (out,).
    w_qkv_t = jax.random.normal(kw1, (3 * dim, dim), dtype=jnp.float32) * 0.05
    b_qkv = jax.random.normal(kb1, (3 * dim,), dtype=jnp.float32) * 0.05
    w_proj_t = jax.random.normal(kw2, (dim, dim), dtype=jnp.float32) * 0.05
    b_proj = jax.random.normal(kb2, (dim,), dtype=jnp.float32) * 0.05

    # Pre-transpose to (in, out) so kernel/ref compute y = x @ W + b.
    w_qkv = w_qkv_t.T
    w_proj = w_proj_t.T

    out = attention3d_pallas(x, w_qkv, b_qkv, w_proj, b_proj,
                             num_heads=num_heads)
    out = jax.block_until_ready(out)

    ref = attention3d_ref(x, w_qkv, b_qkv, w_proj, b_proj,
                          num_heads=num_heads)
    ref = jax.block_until_ready(ref)

    assert out.shape == (B, N, dim)
    # Tolerance covers bf16 MXU operands (f32 accumulation) and the EUP
    # approximate reciprocal in the softmax normalization.
    assert jnp.allclose(out, ref, atol=3e-2, rtol=3e-2), (
        f"max abs err {jnp.max(jnp.abs(out - ref))}")

    print("KERNEL_OK")
</pallas_src>

<mosaic_0001>
module attributes {stable_mosaic.version = 11 : i64} {
  func.func @_attention_kernel(%arg0: memref<16x32xbf16, #tpu.memory_space<vmem>>, %arg1: memref<32x128xbf16, #tpu.memory_space<vmem>>, %arg2: memref<32x128xbf16, #tpu.memory_space<vmem>>, %arg3: memref<81x128xf32, #tpu.memory_space<vmem>>, %arg4: memref<128x32xbf16, #tpu.memory_space<vmem>>, %arg5: memref<16x32xf32, #tpu.memory_space<vmem>>) attributes {dimension_semantics = [], scalar_prefetch = 0 : i64, scratch_operands = 0 : i64, tpu.core_type = #tpu.core_type<tc>} {
    %c0 = arith.constant 0 : index
    %c0_0 = arith.constant 0 : index
    %0 = vector.load %arg3[%c0, %c0_0] : memref<81x128xf32, #tpu.memory_space<vmem>>, vector<16x128xf32>
    %c16 = arith.constant 16 : index
    %c0_1 = arith.constant 0 : index
    %1 = vector.load %arg3[%c16, %c0_1] : memref<81x128xf32, #tpu.memory_space<vmem>>, vector<32x128xf32>
    %c48 = arith.constant 48 : index
    %c0_2 = arith.constant 0 : index
    %2 = vector.load %arg3[%c48, %c0_2] : memref<81x128xf32, #tpu.memory_space<vmem>>, vector<32x128xf32>
    %c80 = arith.constant 80 : index
    %c0_3 = arith.constant 0 : index
    %3 = vector.load %arg3[%c80, %c0_3] : memref<81x128xf32, #tpu.memory_space<vmem>>, vector<1x128xf32>
    %c0_4 = arith.constant 0 : index
    %c0_5 = arith.constant 0 : index
    %4 = vector.load %arg0[%c0_4, %c0_5] : memref<16x32xbf16, #tpu.memory_space<vmem>>, vector<16x32xbf16>
    %c0_6 = arith.constant 0 : index
    %c0_7 = arith.constant 0 : index
    %5 = vector.load %arg1[%c0_6, %c0_7] : memref<32x128xbf16, #tpu.memory_space<vmem>>, vector<32x128xbf16>
    %c0_8 = arith.constant 0 : index
    %c0_9 = arith.constant 0 : index
    %6 = vector.load %arg2[%c0_8, %c0_9] : memref<32x128xbf16, #tpu.memory_space<vmem>>, vector<32x128xbf16>
    %c0_10 = arith.constant 0 : index
    %c0_11 = arith.constant 0 : index
    %7 = vector.load %arg4[%c0_10, %c0_11] : memref<128x32xbf16, #tpu.memory_space<vmem>>, vector<128x32xbf16>
    %8 = vector.extract_strided_slice %6 {offsets = [0, 0], sizes = [32, 64], strides = [1, 1]} : vector<32x128xbf16> to vector<32x64xbf16>
    %cst = arith.constant dense<0.000000e+00> : vector<16x64xf32>
    %9 = tpu.matmul %4, %8, %cst {dimension_numbers = #tpu.dot_dimension_numbers<[1], [0], [0], [1], [0, 0, 1, 1], [], []>} : vector<16x32xbf16>, vector<32x64xbf16>, vector<16x64xf32> -> vector<16x64xf32>
    %10 = vector.extract_strided_slice %3 {offsets = [0, 0], sizes = [1, 64], strides = [1, 1]} : vector<1x128xf32> to vector<1x64xf32>
    %11 = vector.broadcast %10 : vector<1x64xf32> to vector<16x64xf32>
    %12 = arith.addf %9, %11 : vector<16x64xf32>
    %13 = vector.extract_strided_slice %12 {offsets = [0, 0], sizes = [16, 32], strides = [1, 1]} : vector<16x64xf32> to vector<16x32xf32>
    %14 = arith.truncf %13 : vector<16x32xf32> to vector<16x32xbf16>
    %15 = vector.extract_strided_slice %12 {offsets = [0, 32], sizes = [16, 32], strides = [1, 1]} : vector<16x64xf32> to vector<16x32xf32>
    %16 = arith.truncf %15 : vector<16x32xf32> to vector<16x32xbf16>
    %17 = vector.extract_strided_slice %6 {offsets = [0, 64], sizes = [32, 32], strides = [1, 1]} : vector<32x128xbf16> to vector<32x32xbf16>
    %cst_12 = arith.constant dense<0.000000e+00> : vector<32x128xf32>
    %18 = tpu.matmul %17, %5, %cst_12 {dimension_numbers = #tpu.dot_dimension_numbers<[1], [0], [0], [1], [0, 0, 1, 1], [], []>} : vector<32x32xbf16>, vector<32x128xbf16>, vector<32x128xf32> -> vector<32x128xf32>
    %19 = arith.addf %18, %2 : vector<32x128xf32>
    %20 = arith.mulf %19, %1 : vector<32x128xf32>
    %21 = arith.truncf %20 : vector<32x128xf32> to vector<32x128xbf16>
    %cst_13 = arith.constant dense<0.000000e+00> : vector<16x128xf32>
    %22 = tpu.matmul %14, %21, %cst_13 {dimension_numbers = #tpu.dot_dimension_numbers<[1], [0], [0], [1], [0, 0, 1, 1], [], []>} : vector<16x32xbf16>, vector<32x128xbf16>, vector<16x128xf32> -> vector<16x128xf32>
    %cst_14 = arith.constant dense<0xFF800000> : vector<16xf32>
    %23 = vector.multi_reduction <maximumf>, %22, %cst_14 [1] : vector<16x128xf32> to vector<16xf32>
    %24 = vector.shape_cast %23 : vector<16xf32> to vector<16x1xf32>
    %25 = vector.broadcast %24 : vector<16x1xf32> to vector<16x128xf32>
    %26 = arith.subf %22, %25 : vector<16x128xf32>
    %27 = math.exp %26 : vector<16x128xf32>
    %28 = arith.mulf %27, %0 : vector<16x128xf32>
    %29 = arith.truncf %28 : vector<16x128xf32> to vector<16x128xbf16>
    %cst_15 = arith.constant dense<0.000000e+00> : vector<16x32xf32>
    %30 = tpu.matmul %29, %7, %cst_15 {dimension_numbers = #tpu.dot_dimension_numbers<[1], [0], [0], [1], [0, 0, 1, 1], [], []>} : vector<16x128xbf16>, vector<128x32xbf16>, vector<16x32xf32> -> vector<16x32xf32>
    %cst_16 = arith.constant 1.000000e-30 : f32
    %31 = vector.broadcast %cst_16 : f32 to vector<16x32xf32>
    %32 = arith.maximumf %30, %31 : vector<16x32xf32>
    %33 = tpu.concatenate %16, %16, %16, %16, %16, %16, %16, %16 in 0 : vector<16x32xbf16>, vector<16x32xbf16>, vector<16x32xbf16>, vector<16x32xbf16>, vector<16x32xbf16>, vector<16x32xbf16>, vector<16x32xbf16>, vector<16x32xbf16> -> vector<128x32xbf16>
    %34 = arith.mulf %33, %7 : vector<128x32xbf16>
    %cst_17 = arith.constant dense<0.000000e+00> : vector<16x32xf32>
    %35 = tpu.matmul %29, %34, %cst_17 {dimension_numbers = #tpu.dot_dimension_numbers<[1], [0], [0], [1], [0, 0, 1, 1], [], []>} : vector<16x128xbf16>, vector<128x32xbf16>, vector<16x32xf32> -> vector<16x32xf32>
    %36 = tpu.reciprocal %32 {approx = true} : vector<16x32xf32> -> vector<16x32xf32>
    %37 = arith.mulf %35, %36 : vector<16x32xf32>
    %38 = arith.truncf %37 : vector<16x32xf32> to vector<16x32xbf16>
    %39 = vector.extract_strided_slice %6 {offsets = [0, 96], sizes = [32, 32], strides = [1, 1]} : vector<32x128xbf16> to vector<32x32xbf16>
    %cst_18 = arith.constant dense<0.000000e+00> : vector<16x32xf32>
    %40 = tpu.matmul %38, %39, %cst_18 {dimension_numbers = #tpu.dot_dimension_numbers<[1], [0], [0], [1], [0, 0, 1, 1], [], []>} : vector<16x32xbf16>, vector<32x32xbf16>, vector<16x32xf32> -> vector<16x32xf32>
    %41 = vector.extract_strided_slice %3 {offsets = [0, 64], sizes = [1, 32], strides = [1, 1]} : vector<1x128xf32> to vector<1x32xf32>
    %42 = vector.broadcast %41 : vector<1x32xf32> to vector<16x32xf32>
    %43 = arith.addf %40, %42 : vector<16x32xf32>
    %c0_19 = arith.constant 0 : index
    %c0_20 = arith.constant 0 : index
    %44 = vector.load %arg5[%c0_19, %c0_20] : memref<16x32xf32, #tpu.memory_space<vmem>>, vector<16x32xf32>
    tpu.vector_store %arg5[%c0_19, %c0_20], %43 {strides = array<i32>} : memref<16x32xf32, #tpu.memory_space<vmem>>, vector<16x32xf32>,
    return
  }
}

</mosaic_0001>

<llo_original>
// kernel: tpu_custom_call.1
$region0: #{tpu_custom_call.1}
  #allocation0 [shape = 'u32[]', space=smem, size = 0x4, offset = 0x4, fixed_abs, tag = 'smem constant byte address 0x4 - core index']
  #allocation1 [shape = 'u32[144,128]{1,0:T(1,128)}', space=vmem, size = 0x12000, scoped, tag = 'internal scratch']
  %s0 = inlined_call_operand.hbm [shape: bf16[16,32], index: 0, kind: input, shape index: {}]
  %s1 = inlined_call_operand.hbm [shape: bf16[32,128], index: 1, kind: input, shape index: {}]
  %s2 = inlined_call_operand.hbm [shape: bf16[32,128], index: 2, kind: input, shape index: {}]
  %s3 = inlined_call_operand.vmem [shape: f32[81,128], index: 3, kind: input, shape index: {}]
  %s4 = inlined_call_operand.vmem [shape: bf16[128,32], index: 4, kind: input, shape index: {}]
  %s5 = inlined_call_operand.hbm [shape: f32[16,32], index: 5, kind: output, shape index: {}]
  %s6 = sld [smem:[#allocation0]]
  $region42: #{tpu_custom_call.1} parent=0
    _
  %s8 = ssub.s32 1, %s6
  %s9 = scalar_select 0, %s8, %s6
  $region1: #{tpu_custom_call.1} parent=0
    #allocation2 [shape = 'u8[4096]{0}', space=vmem, size = 0x1000, scoped, tag = 'input window, operand 0, single buffered']
    #allocation3 [shape = 's32[1]{0}', space=sflag, size = 0x4, scoped, tag = 'scoped memory for tpu_custom_call.1']
    #allocation4 [shape = 's32[1]{0}', space=sflag, size = 0x4, scoped, tag = 'scoped memory for tpu_custom_call.1']
    #allocation5 [shape = 'u8[8192]{0}', space=vmem, size = 0x2000, scoped, tag = 'input window, operand 1, single buffered']
    #allocation6 [shape = 's32[1]{0}', space=sflag, size = 0x4, scoped, tag = 'scoped memory for tpu_custom_call.1']
    #allocation7 [shape = 'u8[8192]{0}', space=vmem, size = 0x2000, scoped, tag = 'input window, operand 2, single buffered']
    #allocation8 [shape = 'u8[8192]{0}', space=vmem, size = 0x2000, scoped, tag = 'output window, operand 0, single buffered']
    %10 = vsyncpa [#allocation3], 0
    %11 = vsyncpa [#allocation6], 0
    %12 = vsyncpa [#allocation4], 0
    // Predicated region
    $region2: #{tpu_custom_call.1} parent=1 // pred_check
      _
    $region3: #{tpu_custom_call.1} parent=1 // pred_check_branch
      %14 = sbr.rel (0) target = $region5
    $region4: #{tpu_custom_call.1} parent=1 // pred_region
      %s16 = ssub.s32 128, 128
      %17 = vsyncadd [#allocation3], %s16
      %s18 = sshll.u32 [#allocation2], 4
      %s19 = int_to_ptr.vmem [resolvable:$true] %s18
      %24 = dma.hbm_to_vmem [thread:$0]  %s0, 128, %s19, [#allocation3], 64, 64, 4
    $region5: #{tpu_custom_call.1} parent=1 // pred_fallthru
      _
    // Predicated region
    $region6: #{tpu_custom_call.1} parent=1 // pred_check
      _
    $region7: #{tpu_custom_call.1} parent=1 // pred_check_branch
      %26 = sbr.rel (0) target = $region9
    $region8: #{tpu_custom_call.1} parent=1 // pred_region
      %s28 = ssub.s32 256, 256
      %29 = vsyncadd [#allocation6], %s28
      %s30 = sshll.u32 [#allocation5], 4
      %s31 = int_to_ptr.vmem [resolvable:$true] %s30
      %36 = dma.hbm_to_vmem [thread:$0]  %s1, 256, %s31, [#allocation6], 64, 64, 4
    $region9: #{tpu_custom_call.1} parent=1 // pred_fallthru
      _
    // Predicated region
    $region10: #{tpu_custom_call.1} parent=1 // pred_check
      _
    $region11: #{tpu_custom_call.1} parent=1 // pred_check_branch
      %38 = sbr.rel (0) target = $region13
    $region12: #{tpu_custom_call.1} parent=1 // pred_region
      %s40 = ssub.s32 256, 256
      %41 = vsyncadd [#allocation6], %s40
      %s42 = sshll.u32 [#allocation7], 4
      %s43 = int_to_ptr.vmem [resolvable:$true] %s42
      %48 = dma.hbm_to_vmem [thread:$0]  %s2, 256, %s43, [#allocation6], 64, 64, 4
    $region13: #{tpu_custom_call.1} parent=1 // pred_fallthru
      _
    // Predicated region
    $region14: #{tpu_custom_call.1} parent=1 // pred_check
      _
    $region15: #{tpu_custom_call.1} parent=1 // pred_check_branch
      %50 = sbr.rel (0) target = $region17
    $region16: #{tpu_custom_call.1} parent=1 // pred_region
      _
    $region17: #{tpu_custom_call.1} parent=1 // pred_fallthru
      _
    // Predicated region
    $region18: #{tpu_custom_call.1} parent=1 // pred_check
      _
    $region19: #{tpu_custom_call.1} parent=1 // pred_check_branch
      %52 = sbr.rel (0) target = $region21
    $region20: #{tpu_custom_call.1} parent=1 // pred_region
      _
    $region21: #{tpu_custom_call.1} parent=1 // pred_fallthru
      _
    // Predicated region
    $region22: #{tpu_custom_call.1} parent=1 // pred_check
      _
    $region23: #{tpu_custom_call.1} parent=1 // pred_check_branch
      %54 = sbr.rel (0) target = $region25
    $region24: #{tpu_custom_call.1} parent=1 // pred_region
      %55 = dma.done [#allocation3], 128
    $region25: #{tpu_custom_call.1} parent=1 // pred_fallthru
      _
    // Predicated region
    $region26: #{tpu_custom_call.1} parent=1 // pred_check
      _
    $region27: #{tpu_custom_call.1} parent=1 // pred_check_branch
      %57 = sbr.rel (0) target = $region29
    $region28: #{tpu_custom_call.1} parent=1 // pred_region
      %58 = dma.done [#allocation6], 256
    $region29: #{tpu_custom_call.1} parent=1 // pred_fallthru
      _
    // Predicated region
    $region30: #{tpu_custom_call.1} parent=1 // pred_check
      _
    $region31: #{tpu_custom_call.1} parent=1 // pred_check_branch
      %60 = sbr.rel (0) target = $region33
    $region32: #{tpu_custom_call.1} parent=1 // pred_region
      %61 = dma.done [#allocation6], 256
    $region33: #{tpu_custom_call.1} parent=1 // pred_fallthru
      _
    %v63 = vld [vmem:[%s3] sm:$0xff]
    %v64 = vld [vmem:[%s3 + $0x8] sm:$0xff]
    %v65 = vld [vmem:[%s3 + $0x10] sm:$0xff]
    %v66 = vld [vmem:[%s3 + $0x18] sm:$0xff]
    %v67 = vld [vmem:[%s3 + $0x20] sm:$0xff]
    %v68 = vld [vmem:[%s3 + $0x28] sm:$0xff]
    %v69 = vld [vmem:[%s3 + $0x30] sm:$0xff]
    %v70 = vld [vmem:[%s3 + $0x38] sm:$0xff]
    %v71 = vld [vmem:[%s3 + $0x40] sm:$0xff]
    %v72 = vld [vmem:[%s3 + $0x48] sm:$0xff]
    %v73 = vld [vmem:[%s3 + $0x50] sm:$0x1]
    %v74 = vld [vmem:[#allocation2] sm:$0xf]
    %v75 = vld [vmem:[#allocation2 + $0x4] sm:$0xf]
    %v76 = vld [vmem:[#allocation5] sm:$0xf]
    %v77 = vld [vmem:[#allocation5 + $0x4] sm:$0xf]
    %v78 = vld [vmem:[#allocation5 + $0x8] sm:$0xf]
    %v79 = vld [vmem:[#allocation5 + $0xc] sm:$0xf]
    %v80 = vld [vmem:[#allocation7] sm:$0xf]
    %v81 = vld [vmem:[#allocation7 + $0x4] sm:$0xf]
    %v82 = vld [vmem:[#allocation7 + $0x8] sm:$0xf]
    %v83 = vld [vmem:[#allocation7 + $0xc] sm:$0xf]
    %v84 = vld [vmem:[%s4] sm:$0xf]
    %v85 = vld [vmem:[%s4 + $0x4] sm:$0xf]
    %v86 = vld [vmem:[%s4 + $0x8] sm:$0xf]
    %v87 = vld [vmem:[%s4 + $0xc] sm:$0xf]
    %v88 = vld [vmem:[%s4 + $0x10] sm:$0xf]
    %v89 = vld [vmem:[%s4 + $0x14] sm:$0xf]
    %v90 = vld [vmem:[%s4 + $0x18] sm:$0xf]
    %v91 = vld [vmem:[%s4 + $0x1c] sm:$0xf]
    %v92 = vld [vmem:[%s4 + $0x20] sm:$0xf]
    %v93 = vld [vmem:[%s4 + $0x24] sm:$0xf]
    %v94 = vld [vmem:[%s4 + $0x28] sm:$0xf]
    %v95 = vld [vmem:[%s4 + $0x2c] sm:$0xf]
    %v96 = vld [vmem:[%s4 + $0x30] sm:$0xf]
    %v97 = vld [vmem:[%s4 + $0x34] sm:$0xf]
    %v98 = vld [vmem:[%s4 + $0x38] sm:$0xf]
    %v99 = vld [vmem:[%s4 + $0x3c] sm:$0xf]
    %v100 = vlaneseq
    %v101 = vshrl.u32 %v100, 7
    %v102 = vsub.s32 0, %v101
    %v103 = vrot.slane %v73, %v102
    %v106 = vunpack.c.l.b16 %v74
    %v107 = vunpack.c.l.b16 %v75
    %v108 = vpack.c.b16 %v107, %v106
    %v113 = vunpack.c.l.b16 %v80
    %v114 = vunpack.c.l.b16 %v81
    %v115 = vunpack.c.l.b16 %v82
    %v116 = vunpack.c.l.b16 %v83
    %v117 = vpack.c.b16 %v114, %v113
    %v118 = vpack.c.b16 %v116, %v115
    %vm121 = vcmask 261120
    %v123 = vsel %vm121, %v108, 0
    %125 = vmatprep.subr.bf16.mxu0 0
    %126 = vmatpush1.bf16.msra.mxu0 %v117
    %127 = vmatprep.subr.bf16.mxu0 0
    %128 = vmatpush1.bf16.msra.mxu0 %v118
    %129 = vmatprep.subr.bf16.mxu0 0
    %130 = vmatpush1.bf16.msra.mxu0 0
    %131 = vmatprep.subr.bf16.mxu0 0
    %132 = vmatpush1.bf16.msra.mxu0 0
    %133 = vmatprep.subr.bf16.mxu0 0
    %134 = vmatpush1.bf16.msra.mxu0 0
    %135 = vmatprep.subr.bf16.mxu0 0
    %136 = vmatpush1.bf16.msra.mxu0 0
    %137 = vmatprep.subr.bf16.mxu0 0
    %138 = vmatpush1.bf16.msra.mxu0 0
    %139 = vmatprep.subr.bf16.mxu0 0
    %140 = vmatpush1.bf16.msra.mxu0 0
    %141 = vmatprep.subr.bf16.mxu0 0
    %142 = vmatpush1.bf16.msra.mxu0 0
    %143 = vmatprep.subr.bf16.mxu0 0
    %144 = vmatpush1.bf16.msra.mxu0 0
    %145 = vmatprep.subr.bf16.mxu0 0
    %146 = vmatpush1.bf16.msra.mxu0 0
    %147 = vmatprep.subr.bf16.mxu0 0
    %148 = vmatpush1.bf16.msra.mxu0 0
    %149 = vmatprep.subr.bf16.mxu0 0
    %150 = vmatpush1.bf16.msra.mxu0 0
    %151 = vmatprep.subr.bf16.mxu0 0
    %152 = vmatpush1.bf16.msra.mxu0 0
    %153 = vmatprep.subr.bf16.mxu0 0
    %154 = vmatpush1.bf16.msra.mxu0 0
    %155 = vmatprep.subr.bf16.mxu0 0
    %156 = vmatpush1.bf16.msra.mxu0 0
    %157 = vmatprep.mubr.bf16.mxu0 0
    %158 = vmatmul.mubr.bf16.gmra.mrb[0].mxu0 %v123
    %v159 = vpop.f32.mrb[0].mxu0
    %v160 = vadd.f32 %v103, %v159
    %v161 = vpop.f32.mrb[0].mxu0
    %v162 = vpop.f32.mrb[0].mxu0
    %v163 = vadd.f32 %v103, %v162
    %v164 = vpop.f32.mrb[0].mxu0
    %165 = vdwg.mxu0
    %v166 = vpack.c.bf16 %v163, %v160
    %167 = vrot.lane.b32.xlu0 %v117, 64
    %v168 = vpop.permute.xlu0 %167
    %169 = vrot.lane.b32.xlu0 %v118, 64
    %v170 = vpop.permute.xlu0 %169
    %v175 = vunpack.c.l.b16 %v76
    %v176 = vunpack.c.l.b16 %v77
    %v177 = vunpack.c.l.b16 %v78
    %v178 = vunpack.c.l.b16 %v79
    %v179 = vpack.c.b16 %v176, %v175
    %v180 = vpack.c.b16 %v178, %v177
    %v184 = vsel %vm121, %v168, 0
    %v187 = vsel %vm121, %v170, 0
    %189 = vmatprep.subr.bf16.mxu0 0
    %190 = vmatpush1.bf16.msra.mxu0 %v179
    %191 = vmatprep.subr.bf16.mxu0 0
    %192 = vmatpush1.bf16.msra.mxu0 %v180
    %193 = vmatprep.subr.bf16.mxu0 0
    %194 = vmatpush1.bf16.msra.mxu0 0
    %195 = vmatprep.subr.bf16.mxu0 0
    %196 = vmatpush1.bf16.msra.mxu0 0
    %197 = vmatprep.subr.bf16.mxu0 0
    %198 = vmatpush1.bf16.msra.mxu0 0
    %199 = vmatprep.subr.bf16.mxu0 0
    %200 = vmatpush1.bf16.msra.mxu0 0
    %201 = vmatprep.subr.bf16.mxu0 0
    %202 = vmatpush1.bf16.msra.mxu0 0
    %203 = vmatprep.subr.bf16.mxu0 0
    %204 = vmatpush1.bf16.msra.mxu0 0
    %205 = vmatprep.subr.bf16.mxu0 0
    %206 = vmatpush1.bf16.msra.mxu0 0
    %207 = vmatprep.subr.bf16.mxu0 0
    %208 = vmatpush1.bf16.msra.mxu0 0
    %209 = vmatprep.subr.bf16.mxu0 0
    %210 = vmatpush1.bf16.msra.mxu0 0
    %211 = vmatprep.subr.bf16.mxu0 0
    %212 = vmatpush1.bf16.msra.mxu0 0
    %213 = vmatprep.subr.bf16.mxu0 0
    %214 = vmatpush1.bf16.msra.mxu0 0
    %215 = vmatprep.subr.bf16.mxu0 0
    %216 = vmatpush1.bf16.msra.mxu0 0
    %217 = vmatprep.subr.bf16.mxu0 0
    %218 = vmatpush1.bf16.msra.mxu0 0
    %219 = vmatprep.subr.bf16.mxu0 0
    %220 = vmatpush1.bf16.msra.mxu0 0
    %221 = vmatprep.mubr.bf16.mxu0 0
    %222 = vmatmul.mubr.bf16.gmra.mrb[0].mxu0 %v184
    %v223 = vpop.f32.mrb[0].mxu0
    %v224 = vadd.f32 %v69, %v223
    %v225 = vpop.f32.mrb[0].mxu0
    %v226 = vpop.f32.mrb[0].mxu0
    %v227 = vadd.f32 %v70, %v226
    %v228 = vpop.f32.mrb[0].mxu0
    %229 = vmatprep.mubr.bf16.mxu0 0
    %230 = vmatmul.mubr.bf16.gmra.mrb[0].mxu0 %v187
    %v231 = vpop.f32.mrb[0].mxu0
    %v232 = vadd.f32 %v71, %v231
    %v233 = vpop.f32.mrb[0].mxu0
    %v234 = vpop.f32.mrb[0].mxu0
    %v235 = vadd.f32 %v72, %v234
    %v236 = vpop.f32.mrb[0].mxu0
    %237 = vdwg.mxu0
    %v238 = vmul.f32 %v224, %v65
    %v239 = vmul.f32 %v227, %v66
    %v240 = vmul.f32 %v232, %v67
    %v241 = vmul.f32 %v235, %v68
    %v242 = vpack.c.bf16 %v239, %v238
    %v243 = vpack.c.bf16 %v241, %v240
    %v245 = vsel %vm121, %v166, 0
    %247 = vmatprep.subr.bf16.mxu0 0
    %248 = vmatpush1.bf16.msra.mxu0 %v242
    %249 = vmatprep.subr.bf16.mxu0 0
    %250 = vmatpush1.bf16.msra.mxu0 %v243
    %251 = vmatprep.subr.bf16.mxu0 0
    %252 = vmatpush1.bf16.msra.mxu0 0
    %253 = vmatprep.subr.bf16.mxu0 0
    %254 = vmatpush1.bf16.msra.mxu0 0
    %255 = vmatprep.subr.bf16.mxu0 0
    %256 = vmatpush1.bf16.msra.mxu0 0
    %257 = vmatprep.subr.bf16.mxu0 0
    %258 = vmatpush1.bf16.msra.mxu0 0
    %259 = vmatprep.subr.bf16.mxu0 0
    %260 = vmatpush1.bf16.msra.mxu0 0
    %261 = vmatprep.subr.bf16.mxu0 0
    %262 = vmatpush1.bf16.msra.mxu0 0
    %263 = vmatprep.subr.bf16.mxu0 0
    %264 = vmatpush1.bf16.msra.mxu0 0
    %265 = vmatprep.subr.bf16.mxu0 0
    %266 = vmatpush1.bf16.msra.mxu0 0
    %267 = vmatprep.subr.bf16.mxu0 0
    %268 = vmatpush1.bf16.msra.mxu0 0
    %269 = vmatprep.subr.bf16.mxu0 0
    %270 = vmatpush1.bf16.msra.mxu0 0
    %271 = vmatprep.subr.bf16.mxu0 0
    %272 = vmatpush1.bf16.msra.mxu0 0
    %273 = vmatprep.subr.bf16.mxu0 0
    %274 = vmatpush1.bf16.msra.mxu0 0
    %275 = vmatprep.subr.bf16.mxu0 0
    %276 = vmatpush1.bf16.msra.mxu0 0
    %277 = vmatprep.subr.bf16.mxu0 0
    %278 = vmatpush1.bf16.msra.mxu0 0
    %279 = vmatprep.mubr.bf16.mxu0 0
    %280 = vmatmul.mubr.bf16.gmra.mrb[0].mxu0 %v245
    %v281 = vpop.f32.mrb[0].mxu0
    %v282 = vadd.f32 0.0, %v281
    %v283 = vpop.f32.mrb[0].mxu0
    %v284 = vpop.f32.mrb[0].mxu0
    %v285 = vadd.f32 0.0, %v284
    %v286 = vpop.f32.mrb[0].mxu0
    %287 = vdwg.mxu0
    %288 = vmax.xlane.f32.xlu0 %v282
    %v289 = vpop.xlane.xlu0 %288
    %290 = vmax.xlane.f32.xlu0 %v285
    %v291 = vpop.xlane.xlu0 %290
    %v292 = vsub.f32 %v282, %v289
    %v293 = vsub.f32 %v285, %v291
    %v294 = vmul.f32 %v292, 1.442695
    %v295 = vpow.pop %v294
    %v296 = vmul.f32 %v293, 1.442695
    %v297 = vpow.pop %v296
    %v298 = vmul.f32 %v295, %v63
    %v299 = vmul.f32 %v297, %v64
    %v300 = vpack.c.bf16 %v299, %v298
    %v317 = vunpack.c.l.b16 %v84
    %v318 = vunpack.c.l.b16 %v85
    %v319 = vunpack.c.l.b16 %v86
    %v320 = vunpack.c.l.b16 %v87
    %v321 = vunpack.c.l.b16 %v88
    %v322 = vunpack.c.l.b16 %v89
    %v323 = vunpack.c.l.b16 %v90
    %v324 = vunpack.c.l.b16 %v91
    %v325 = vunpack.c.l.b16 %v92
    %v326 = vunpack.c.l.b16 %v93
    %v327 = vunpack.c.l.b16 %v94
    %v328 = vunpack.c.l.b16 %v95
    %v329 = vunpack.c.l.b16 %v96
    %v330 = vunpack.c.l.b16 %v97
    %v331 = vunpack.c.l.b16 %v98
    %v332 = vunpack.c.l.b16 %v99
    %v333 = vpack.c.b16 %v318, %v317
    %v334 = vpack.c.b16 %v320, %v319
    %v335 = vpack.c.b16 %v322, %v321
    %v336 = vpack.c.b16 %v324, %v323
    %v337 = vpack.c.b16 %v326, %v325
    %v338 = vpack.c.b16 %v328, %v327
    %v339 = vpack.c.b16 %v330, %v329
    %v340 = vpack.c.b16 %v332, %v331
    %349 = vmatprep.subr.bf16.mxu0 0
    %350 = vmatpush1.bf16.msra.mxu0 %v333
    %351 = vmatprep.subr.bf16.mxu0 0
    %352 = vmatpush1.bf16.msra.mxu0 %v334
    %353 = vmatprep.subr.bf16.mxu0 0
    %354 = vmatpush1.bf16.msra.mxu0 %v335
    %355 = vmatprep.subr.bf16.mxu0 0
    %356 = vmatpush1.bf16.msra.mxu0 %v336
    %357 = vmatprep.subr.bf16.mxu0 0
    %358 = vmatpush1.bf16.msra.mxu0 %v337
    %359 = vmatprep.subr.bf16.mxu0 0
    %360 = vmatpush1.bf16.msra.mxu0 %v338
    %361 = vmatprep.subr.bf16.mxu0 0
    %362 = vmatpush1.bf16.msra.mxu0 %v339
    %363 = vmatprep.subr.bf16.mxu0 0
    %364 = vmatpush1.bf16.msra.mxu0 %v340
    %365 = vmatprep.subr.bf16.mxu0 0
    %366 = vmatpush1.bf16.msra.mxu0 0
    %367 = vmatprep.subr.bf16.mxu0 0
    %368 = vmatpush1.bf16.msra.mxu0 0
    %369 = vmatprep.subr.bf16.mxu0 0
    %370 = vmatpush1.bf16.msra.mxu0 0
    %371 = vmatprep.subr.bf16.mxu0 0
    %372 = vmatpush1.bf16.msra.mxu0 0
    %373 = vmatprep.subr.bf16.mxu0 0
    %374 = vmatpush1.bf16.msra.mxu0 0
    %375 = vmatprep.subr.bf16.mxu0 0
    %376 = vmatpush1.bf16.msra.mxu0 0
    %377 = vmatprep.subr.bf16.mxu0 0
    %378 = vmatpush1.bf16.msra.mxu0 0
    %379 = vmatprep.subr.bf16.mxu0 0
    %380 = vmatpush1.bf16.msra.mxu0 0
    %381 = vmatprep.mubr.bf16.mxu0 0
    %382 = vmatmul.mubr.bf16.gmra.mrb[0].mxu0 %v300
    %v383 = vpop.f32.mrb[0].mxu0
    %v384 = vadd.f32 0.0, %v383
    %v385 = vpop.f32.mrb[0].mxu0
    %v386 = vpop.f32.mrb[0].mxu0
    %v387 = vadd.f32 0.0, %v386
    %v388 = vpop.f32.mrb[0].mxu0
    %389 = vdwg.mxu0
    %v390 = vmax.f32 %v384, 1e-30
    %v391 = vmax.f32 %v387, 1e-30
    %392 = vrot.lane.b32.xlu0 %v333, 32
    %v393 = vpop.permute.xlu0 %392
    %394 = vrot.lane.b32.xlu0 %v334, 32
    %v395 = vpop.permute.xlu0 %394
    %396 = vrot.lane.b32.xlu0 %v335, 32
    %v397 = vpop.permute.xlu0 %396
    %398 = vrot.lane.b32.xlu0 %v336, 32
    %v399 = vpop.permute.xlu0 %398
    %400 = vrot.lane.b32.xlu0 %v337, 32
    %v401 = vpop.permute.xlu0 %400
    %402 = vrot.lane.b32.xlu0 %v338, 32
    %v403 = vpop.permute.xlu0 %402
    %404 = vrot.lane.b32.xlu0 %v339, 32
    %v405 = vpop.permute.xlu0 %404
    %406 = vrot.lane.b32.xlu0 %v340, 32
    %v407 = vpop.permute.xlu0 %406
    %v416 = vmul.bf16 %v166, %v393
    %v417 = vmul.bf16 %v166, %v395
    %v418 = vmul.bf16 %v166, %v397
    %v419 = vmul.bf16 %v166, %v399
    %v420 = vmul.bf16 %v166, %v401
    %v421 = vmul.bf16 %v166, %v403
    %v422 = vmul.bf16 %v166, %v405
    %v423 = vmul.bf16 %v166, %v407
    %432 = vrot.lane.b32.xlu0 %v416, 96
    %v433 = vpop.permute.xlu0 %432
    %434 = vrot.lane.b32.xlu0 %v417, 96
    %v435 = vpop.permute.xlu0 %434
    %436 = vrot.lane.b32.xlu0 %v418, 96
    %v437 = vpop.permute.xlu0 %436
    %438 = vrot.lane.b32.xlu0 %v419, 96
    %v439 = vpop.permute.xlu0 %438
    %440 = vrot.lane.b32.xlu0 %v420, 96
    %v441 = vpop.permute.xlu0 %440
    %442 = vrot.lane.b32.xlu0 %v421, 96
    %v443 = vpop.permute.xlu0 %442
    %444 = vrot.lane.b32.xlu0 %v422, 96
    %v445 = vpop.permute.xlu0 %444
    %446 = vrot.lane.b32.xlu0 %v423, 96
    %v447 = vpop.permute.xlu0 %446
    %456 = vmatprep.subr.bf16.mxu0 0
    %457 = vmatpush1.bf16.msra.mxu0 %v433
    %458 = vmatprep.subr.bf16.mxu0 0
    %459 = vmatpush1.bf16.msra.mxu0 %v435
    %460 = vmatprep.subr.bf16.mxu0 0
    %461 = vmatpush1.bf16.msra.mxu0 %v437
    %462 = vmatprep.subr.bf16.mxu0 0
    %463 = vmatpush1.bf16.msra.mxu0 %v439
    %464 = vmatprep.subr.bf16.mxu0 0
    %465 = vmatpush1.bf16.msra.mxu0 %v441
    %466 = vmatprep.subr.bf16.mxu0 0
    %467 = vmatpush1.bf16.msra.mxu0 %v443
    %468 = vmatprep.subr.bf16.mxu0 0
    %469 = vmatpush1.bf16.msra.mxu0 %v445
    %470 = vmatprep.subr.bf16.mxu0 0
    %471 = vmatpush1.bf16.msra.mxu0 %v447
    %472 = vmatprep.subr.bf16.mxu0 0
    %473 = vmatpush1.bf16.msra.mxu0 0
    %474 = vmatprep.subr.bf16.mxu0 0
    %475 = vmatpush1.bf16.msra.mxu0 0
    %476 = vmatprep.subr.bf16.mxu0 0
    %477 = vmatpush1.bf16.msra.mxu0 0
    %478 = vmatprep.subr.bf16.mxu0 0
    %479 = vmatpush1.bf16.msra.mxu0 0
    %480 = vmatprep.subr.bf16.mxu0 0
    %481 = vmatpush1.bf16.msra.mxu0 0
    %482 = vmatprep.subr.bf16.mxu0 0
    %483 = vmatpush1.bf16.msra.mxu0 0
    %484 = vmatprep.subr.bf16.mxu0 0
    %485 = vmatpush1.bf16.msra.mxu0 0
    %486 = vmatprep.subr.bf16.mxu0 0
    %487 = vmatpush1.bf16.msra.mxu0 0
    %488 = vmatprep.mubr.bf16.mxu0 0
    %489 = vmatmul.mubr.bf16.gmra.mrb[0].mxu0 %v300
    %v490 = vpop.f32.mrb[0].mxu0
    %v491 = vadd.f32 0.0, %v490
    %v492 = vpop.f32.mrb[0].mxu0
    %v493 = vpop.f32.mrb[0].mxu0
    %v494 = vadd.f32 0.0, %v493
    %v495 = vpop.f32.mrb[0].mxu0
    %496 = vdwg.mxu0
    %v497 = vrcp.pop %v390
    %v498 = vrcp.pop %v391
    %v499 = vmul.f32 %v491, %v497
    %v500 = vmul.f32 %v494, %v498
    %v501 = vpack.c.bf16 %v500, %v499
    %502 = vrot.lane.b32.xlu0 %v117, 32
    %v503 = vpop.permute.xlu0 %502
    %504 = vrot.lane.b32.xlu0 %v118, 32
    %v505 = vpop.permute.xlu0 %504
    %509 = vrot.lane.b32.xlu0 %v103, 64
    %v510 = vpop.permute.xlu0 %509
    %v513 = vsel %vm121, %v501, 0
    %515 = vmatprep.subr.bf16.mxu0 0
    %516 = vmatpush1.bf16.msra.mxu0 %v503
    %517 = vmatprep.subr.bf16.mxu0 0
    %518 = vmatpush1.bf16.msra.mxu0 %v505
    %519 = vmatprep.subr.bf16.mxu0 0
    %520 = vmatpush1.bf16.msra.mxu0 0
    %521 = vmatprep.subr.bf16.mxu0 0
    %522 = vmatpush1.bf16.msra.mxu0 0
    %523 = vmatprep.subr.bf16.mxu0 0
    %524 = vmatpush1.bf16.msra.mxu0 0
    %525 = vmatprep.subr.bf16.mxu0 0
    %526 = vmatpush1.bf16.msra.mxu0 0
    %527 = vmatprep.subr.bf16.mxu0 0
    %528 = vmatpush1.bf16.msra.mxu0 0
    %529 = vmatprep.subr.bf16.mxu0 0
    %530 = vmatpush1.bf16.msra.mxu0 0
    %531 = vmatprep.subr.bf16.mxu0 0
    %532 = vmatpush1.bf16.msra.mxu0 0
    %533 = vmatprep.subr.bf16.mxu0 0
    %534 = vmatpush1.bf16.msra.mxu0 0
    %535 = vmatprep.subr.bf16.mxu0 0
    %536 = vmatpush1.bf16.msra.mxu0 0
    %537 = vmatprep.subr.bf16.mxu0 0
    %538 = vmatpush1.bf16.msra.mxu0 0
    %539 = vmatprep.subr.bf16.mxu0 0
    %540 = vmatpush1.bf16.msra.mxu0 0
    %541 = vmatprep.subr.bf16.mxu0 0
    %542 = vmatpush1.bf16.msra.mxu0 0
    %543 = vmatprep.subr.bf16.mxu0 0
    %544 = vmatpush1.bf16.msra.mxu0 0
    %545 = vmatprep.subr.bf16.mxu0 0
    %546 = vmatpush1.bf16.msra.mxu0 0
    %547 = vmatprep.mubr.bf16.mxu0 0
    %548 = vmatmul.mubr.bf16.gmra.mrb[0].mxu0 %v513
    %v549 = vpop.f32.mrb[0].mxu0
    %v550 = vadd.f32 %v510, %v549
    %v551 = vpop.f32.mrb[0].mxu0
    %v552 = vpop.f32.mrb[0].mxu0
    %v553 = vadd.f32 %v510, %v552
    %v554 = vpop.f32.mrb[0].mxu0
    %555 = vdwg.mxu0
    %556 = vst.msk [vmem:[#allocation8] sm:$0xff] %vm121, %v550
    %557 = vst.msk [vmem:[#allocation8 + $0x8] sm:$0xff] %vm121, %v553
    // Predicated region
    $region34: #{tpu_custom_call.1} parent=1 // pred_check
      _
    $region35: #{tpu_custom_call.1} parent=1 // pred_check_branch
      %559 = sbr.rel (0) target = $region37
    $region36: #{tpu_custom_call.1} parent=1 // pred_region
      %s561 = ssub.s32 256, 256
      %562 = vsyncadd [#allocation4], %s561
      %s563 = sshll.u32 [#allocation8], 4
      %s564 = int_to_ptr.vmem [resolvable:$true] %s563
      %569 = dma.vmem_to_hbm [thread:$0]  %s564, 256, %s5, [#allocation4], 128, 128, 8
    $region37: #{tpu_custom_call.1} parent=1 // pred_fallthru
      _
    // Predicated region
    $region38: #{tpu_custom_call.1} parent=1 // pred_check
      _
    $region39: #{tpu_custom_call.1} parent=1 // pred_check_branch
      %571 = sbr.rel (0) target = $region41
    $region40: #{tpu_custom_call.1} parent=1 // pred_region
      %572 = dma.done [#allocation4], 256
    $region41: #{tpu_custom_call.1} parent=1 // pred_fallthru
      _
    %573 = vsyncpa [#allocation3], 1
    %574 = vsyncpa [#allocation6], 1
    %575 = vsyncpa [#allocation4], 1

</llo_original>
